<compile_context>
chip_gen: v7x
topology: tpu7x:2x2x1
jax: 0.10.0
libtpu: 0.0.40
codegen_flags: <defaults>
</compile_context>

<pallas_src>
import functools
import math

import numpy as np
import jax
import jax.numpy as jnp
from jax.experimental import pallas as pl
from jax.experimental.pallas import tpu as pltpu

EPS = 1e-5
C1, C2, K = 16, 32, 3


def cnn_kernel(xpf_ref, m2_ref, w1_ref, g1_ref, be1_ref, w2_ref, g2_ref,
               be2_ref, out_ref, tap_ref, *, nl1, nl2):
    # xpf_ref : (1, Jp)   flattened zero-padded input, batch stride Lp = L+4
    # m2_ref  : (1, Jp)   1.0 on valid conv2-output columns, else 0.0
    # w1_ref  : (16, 3)   conv1 weight (in_ch = 1 squeezed)
    # w2_ref  : (32, 48)  conv2 weight, tap-major: [:, k*16 + c_in]
    # out_ref : (32, Jp)  lane-dense output slab
    # tap_ref : (3, Jp)   VMEM scratch holding the conv1 tap stack
    jp = out_ref.shape[1]
    xpf = xpf_ref[...]                                        # (1, Jp)

    # ---- conv1 taps via XLU lane rolls: tap_k[:, j] = xpf[:, j+k] (wrap) -----
    # Each batch segment is [0,0,x_0..x_{L-1},0,0], so wrapped taps at invalid /
    # padded columns land on zeros and h stays exactly zero there.
    tap_ref[pl.ds(0, 1), :] = xpf
    tap_ref[pl.ds(1, 1), :] = pltpu.roll(xpf, shift=jp - 1, axis=1)
    tap_ref[pl.ds(2, 1), :] = pltpu.roll(xpf, shift=jp - 2, axis=1)

    # ---- conv1 on the MXU: (16,3) @ (3,Jp) -----------------------------------
    h = jnp.dot(w1_ref[...], tap_ref[...],
                preferred_element_type=jnp.float32)           # (16, Jp)

    # ---- BN1 (training-mode stats, single fused pass) + ReLU -----------------
    # conv bias cancels in training-mode BN; invalid columns of h are exact
    # zeros, so no mask is needed (count uses the true N*L1).
    cnt1 = float(nl1)
    s1 = jnp.sum(h, axis=1, keepdims=True)                    # (16, 1)
    ss1 = jnp.sum(h * h, axis=1, keepdims=True)               # (16, 1)
    mean1 = s1 / cnt1
    var1 = jnp.maximum(ss1 / cnt1 - mean1 * mean1, 0.0)
    hn = (h - mean1) * jax.lax.rsqrt(var1 + EPS) * g1_ref[...] + be1_ref[...]
    hn = jnp.maximum(hn, 0.0)                                 # (16, Jp)

    # ---- conv2 (16->32, k=3): one fused (32,48)@(48,Jp) MXU matmul -----------
    hstk = jnp.concatenate(
        [hn,
         pltpu.roll(hn, shift=jp - 1, axis=1),
         pltpu.roll(hn, shift=jp - 2, axis=1)], axis=0)       # (48, Jp)
    y = jnp.dot(w2_ref[...], hstk,
                preferred_element_type=jnp.float32)           # (32, Jp)

    # ---- BN2 (masked single-pass stats) + ReLU --------------------------------
    m2 = m2_ref[...]                                          # (1, Jp)
    cnt2 = float(nl2)
    ym = y * m2
    s2 = jnp.sum(ym, axis=1, keepdims=True)                   # (32, 1)
    ss2 = jnp.sum(ym * y, axis=1, keepdims=True)              # (32, 1)
    mean2 = s2 / cnt2
    var2 = jnp.maximum(ss2 / cnt2 - mean2 * mean2, 0.0)
    yn = (y - mean2) * jax.lax.rsqrt(var2 + EPS) * g2_ref[...] + be2_ref[...]
    out_ref[...] = jnp.maximum(yn, 0.0)                       # (32, Jp)


def _vmem_budget(jp):
    # ~260 Jp-wide f32 rows live across the kernel (input/taps/mask ~6, h/hn 32,
    # hn rolls 32, stacked taps 48, y/ym/yn 96, out 32) + headroom for temps.
    est = 4 * jp * 320 + (2 << 20)
    try:
        phys = int(pltpu.get_tpu_info().vmem_capacity_bytes)
    except Exception:
        phys = 64 * 2 ** 20          # conservative (v7x-sized) fallback
    cap = (phys * 7) // 8            # ~112 MiB on v5e/v6e, ~56 MiB on v7x
    return int(min(cap, max(32 * 2 ** 20, est)))


@jax.jit
def cnn_forward(x, params):
    """x: (N, 1, L) f32  ->  (N, 32*L) f32 (same as torch CNN.forward)."""
    N, C, L = x.shape
    assert C == 1
    Lp = L + 4                      # per-batch padded-input segment length
    L1, L2 = L + 2, L               # conv1 / conv2 output lengths
    NLp = N * Lp
    Jp = ((NLp + 127) // 128) * 128  # lane-dense, 128-aligned slab width

    # flattened zero-padded input; each batch segment is [0,0,x_0..x_{L-1},0,0]
    xp = jnp.pad(x[:, 0, :], ((0, 0), (2, 2)))                     # (N, Lp)
    xpf = jnp.pad(xp.reshape(1, NLp), ((0, 0), (0, Jp - NLp)))     # (1, Jp)

    # conv2-output validity mask (device-side, constant-folded under jit):
    # column j = n*Lp + t is valid iff t < L2.
    j = jnp.arange(Jp)
    m2 = ((j < NLp) & ((j % Lp) < L2)).astype(jnp.float32)[None, :]

    w1 = params["w1"][:, 0, :]                                     # (16, 3)
    # (out, in, k) -> (out, k, in) -> (32, 48): matches the tap-major hn stack
    w2f = jnp.transpose(params["w2"], (0, 2, 1)).reshape(C2, C1 * K)
    col = lambda v: v.reshape(-1, 1)

    kernel = functools.partial(cnn_kernel, nl1=N * L1, nl2=N * L2)
    out2d = pl.pallas_call(
        kernel,
        out_shape=jax.ShapeDtypeStruct((C2, Jp), jnp.float32),
        in_specs=[pl.BlockSpec(memory_space=pltpu.MemorySpace.VMEM)] * 8,
        out_specs=pl.BlockSpec(memory_space=pltpu.MemorySpace.VMEM),
        scratch_shapes=[pltpu.VMEM((K, Jp), jnp.float32)],
        compiler_params=pltpu.CompilerParams(vmem_limit_bytes=_vmem_budget(Jp)),
    )(xpf, m2, w1, col(params["g1"]), col(params["be1"]),
      w2f, col(params["g2"]), col(params["be2"]))

    # extract valid columns, reorder to (N, 32*L) matching torch's .view(N, -1)
    yv = out2d[:, :NLp].reshape(C2, N, Lp)[:, :, :L2]              # (32, N, L)
    return jnp.transpose(yv, (1, 0, 2)).reshape(N, C2 * L2)


# ---------------------------- pure-JAX reference --------------------------------
def _bn(y, g, b):
    m = jnp.mean(y, axis=(0, 2), keepdims=True)
    v = jnp.mean((y - m) ** 2, axis=(0, 2), keepdims=True)
    return (y - m) * jax.lax.rsqrt(v + EPS) * g[None, :, None] + b[None, :, None]


def ref_forward(x, p):
    dn = ("NCH", "OIH", "NCH")
    prec = jax.lax.Precision.HIGHEST
    y = jax.lax.conv_general_dilated(x, p["w1"], (1,), [(2, 2)],
                                     dimension_numbers=dn, precision=prec)
    y = jnp.maximum(_bn(y + p["b1"][None, :, None], p["g1"], p["be1"]), 0.0)
    y = jax.lax.conv_general_dilated(y, p["w2"], (1,), [(0, 0)],
                                     dimension_numbers=dn, precision=prec)
    y = jnp.maximum(_bn(y + p["b2"][None, :, None], p["g2"], p["be2"]), 0.0)
    return y.reshape(x.shape[0], -1)


def init_params(key):
    k1, k2, k3, k4 = jax.random.split(key, 4)
    bnd1 = 1.0 / math.sqrt(1 * K)       # torch Conv1d default init bound
    bnd2 = 1.0 / math.sqrt(C1 * K)
    return {
        "w1": jax.random.uniform(k1, (C1, 1, K), jnp.float32, -bnd1, bnd1),
        "b1": jax.random.uniform(k2, (C1,), jnp.float32, -bnd1, bnd1),
        "g1": jnp.ones((C1,), jnp.float32),      # BatchNorm1d default affine
        "be1": jnp.zeros((C1,), jnp.float32),
        "w2": jax.random.uniform(k3, (C2, C1, K), jnp.float32, -bnd2, bnd2),
        "b2": jax.random.uniform(k4, (C2,), jnp.float32, -bnd2, bnd2),
        "g2": jnp.ones((C2,), jnp.float32),
        "be2": jnp.zeros((C2,), jnp.float32),
    }


if __name__ == "__main__":
    key = jax.random.PRNGKey(0)
    pkey, xkey = jax.random.split(key)
    params = init_params(pkey)

    N, L = 2, 16
    x = jax.random.normal(xkey, (N, 1, L), jnp.float32)

    out = jax.block_until_ready(cnn_forward(x, params))
    ref = jax.block_until_ready(ref_forward(x, params))

    assert out.shape == (N, C2 * L), out.shape
    np.testing.assert_allclose(np.asarray(out), np.asarray(ref),
                               rtol=1e-4, atol=1e-4)
    print("KERNEL_OK")
</pallas_src>

<mosaic_0001>
module attributes {stable_mosaic.version = 11 : i64} {
  func.func @cnn_kernel(%arg0: memref<1x128xf32, #tpu.memory_space<vmem>>, %arg1: memref<1x128xf32, #tpu.memory_space<vmem>>, %arg2: memref<16x3xf32, #tpu.memory_space<vmem>>, %arg3: memref<16x1xf32, #tpu.memory_space<vmem>>, %arg4: memref<16x1xf32, #tpu.memory_space<vmem>>, %arg5: memref<32x48xf32, #tpu.memory_space<vmem>>, %arg6: memref<32x1xf32, #tpu.memory_space<vmem>>, %arg7: memref<32x1xf32, #tpu.memory_space<vmem>>, %arg8: memref<32x128xf32, #tpu.memory_space<vmem>>, %arg9: memref<3x128xf32, #tpu.memory_space<vmem>>) attributes {dimension_semantics = [], scalar_prefetch = 0 : i64, scratch_operands = 1 : i64, tpu.core_type = #tpu.core_type<tc>} {
    %c0 = arith.constant 0 : index
    %c0_0 = arith.constant 0 : index
    %0 = vector.load %arg0[%c0, %c0_0] : memref<1x128xf32, #tpu.memory_space<vmem>>, vector<1x128xf32>
    %c0_1 = arith.constant 0 : index
    %c0_2 = arith.constant 0 : index
    %1 = vector.load %arg9[%c0_1, %c0_2] : memref<3x128xf32, #tpu.memory_space<vmem>>, vector<1x128xf32>
    tpu.vector_store %arg9[%c0_1, %c0_2], %0 {strides = array<i32>} : memref<3x128xf32, #tpu.memory_space<vmem>>, vector<1x128xf32>,
    %c127_i32 = arith.constant 127 : i32
    %2 = tpu.dynamic_rotate %0 by %c127_i32 dim 1 : vector<1x128xf32>, i32 -> vector<1x128xf32>
    %c1 = arith.constant 1 : index
    %c0_3 = arith.constant 0 : index
    %3 = vector.load %arg9[%c1, %c0_3] : memref<3x128xf32, #tpu.memory_space<vmem>>, vector<1x128xf32>
    tpu.vector_store %arg9[%c1, %c0_3], %2 {strides = array<i32>} : memref<3x128xf32, #tpu.memory_space<vmem>>, vector<1x128xf32>,
    %c126_i32 = arith.constant 126 : i32
    %4 = tpu.dynamic_rotate %0 by %c126_i32 dim 1 : vector<1x128xf32>, i32 -> vector<1x128xf32>
    %c2 = arith.constant 2 : index
    %c0_4 = arith.constant 0 : index
    %5 = vector.load %arg9[%c2, %c0_4] : memref<3x128xf32, #tpu.memory_space<vmem>>, vector<1x128xf32>
    tpu.vector_store %arg9[%c2, %c0_4], %4 {strides = array<i32>} : memref<3x128xf32, #tpu.memory_space<vmem>>, vector<1x128xf32>,
    %c0_5 = arith.constant 0 : index
    %c0_6 = arith.constant 0 : index
    %6 = vector.load %arg2[%c0_5, %c0_6] : memref<16x3xf32, #tpu.memory_space<vmem>>, vector<16x3xf32>
    %c0_7 = arith.constant 0 : index
    %c0_8 = arith.constant 0 : index
    %7 = vector.load %arg9[%c0_7, %c0_8] : memref<3x128xf32, #tpu.memory_space<vmem>>, vector<3x128xf32>
    %cst = arith.constant dense<0.000000e+00> : vector<16x128xf32>
    %8 = tpu.matmul %6, %7, %cst {dimension_numbers = #tpu.dot_dimension_numbers<[1], [0], [0], [1], [0, 0, 1, 1], [], []>} : vector<16x3xf32>, vector<3x128xf32>, vector<16x128xf32> -> vector<16x128xf32>
    %cst_9 = arith.constant dense<0.000000e+00> : vector<16xf32>
    %9 = vector.multi_reduction <add>, %8, %cst_9 [1] : vector<16x128xf32> to vector<16xf32>
    %10 = vector.shape_cast %9 : vector<16xf32> to vector<16x1xf32>
    %11 = arith.mulf %8, %8 : vector<16x128xf32>
    %cst_10 = arith.constant dense<0.000000e+00> : vector<16xf32>
    %12 = vector.multi_reduction <add>, %11, %cst_10 [1] : vector<16x128xf32> to vector<16xf32>
    %13 = vector.shape_cast %12 : vector<16xf32> to vector<16x1xf32>
    %cst_11 = arith.constant 3.600000e+01 : f32
    %14 = vector.broadcast %cst_11 : f32 to vector<16x1xf32>
    %15 = arith.divf %10, %14 : vector<16x1xf32>
    %cst_12 = arith.constant 3.600000e+01 : f32
    %16 = vector.broadcast %cst_12 : f32 to vector<16x1xf32>
    %17 = arith.divf %13, %16 : vector<16x1xf32>
    %18 = arith.mulf %15, %15 : vector<16x1xf32>
    %19 = arith.subf %17, %18 : vector<16x1xf32>
    %cst_13 = arith.constant 0.000000e+00 : f32
    %20 = vector.broadcast %cst_13 : f32 to vector<16x1xf32>
    %21 = arith.maximumf %19, %20 : vector<16x1xf32>
    %22 = vector.broadcast %15 : vector<16x1xf32> to vector<16x128xf32>
    %23 = arith.subf %8, %22 : vector<16x128xf32>
    %cst_14 = arith.constant 9.99999974E-6 : f32
    %24 = vector.broadcast %cst_14 : f32 to vector<16x1xf32>
    %25 = arith.addf %21, %24 : vector<16x1xf32>
    %26 = math.rsqrt %25 : vector<16x1xf32>
    %27 = vector.broadcast %26 : vector<16x1xf32> to vector<16x128xf32>
    %28 = arith.mulf %23, %27 : vector<16x128xf32>
    %c0_15 = arith.constant 0 : index
    %c0_16 = arith.constant 0 : index
    %29 = vector.load %arg3[%c0_15, %c0_16] : memref<16x1xf32, #tpu.memory_space<vmem>>, vector<16x1xf32>
    %30 = vector.broadcast %29 : vector<16x1xf32> to vector<16x128xf32>
    %31 = arith.mulf %28, %30 : vector<16x128xf32>
    %c0_17 = arith.constant 0 : index
    %c0_18 = arith.constant 0 : index
    %32 = vector.load %arg4[%c0_17, %c0_18] : memref<16x1xf32, #tpu.memory_space<vmem>>, vector<16x1xf32>
    %33 = vector.broadcast %32 : vector<16x1xf32> to vector<16x128xf32>
    %34 = arith.addf %31, %33 : vector<16x128xf32>
    %cst_19 = arith.constant 0.000000e+00 : f32
    %35 = vector.broadcast %cst_19 : f32 to vector<16x128xf32>
    %36 = arith.maximumf %34, %35 : vector<16x128xf32>
    %c127_i32_20 = arith.constant 127 : i32
    %37 = tpu.dynamic_rotate %36 by %c127_i32_20 dim 1 : vector<16x128xf32>, i32 -> vector<16x128xf32>
    %c126_i32_21 = arith.constant 126 : i32
    %38 = tpu.dynamic_rotate %36 by %c126_i32_21 dim 1 : vector<16x128xf32>, i32 -> vector<16x128xf32>
    %39 = tpu.concatenate %36, %37, %38 in 0 : vector<16x128xf32>, vector<16x128xf32>, vector<16x128xf32> -> vector<48x128xf32>
    %c0_22 = arith.constant 0 : index
    %c0_23 = arith.constant 0 : index
    %40 = vector.load %arg5[%c0_22, %c0_23] : memref<32x48xf32, #tpu.memory_space<vmem>>, vector<32x48xf32>
    %cst_24 = arith.constant dense<0.000000e+00> : vector<32x128xf32>
    %41 = tpu.matmul %40, %39, %cst_24 {dimension_numbers = #tpu.dot_dimension_numbers<[1], [0], [0], [1], [0, 0, 1, 1], [], []>} : vector<32x48xf32>, vector<48x128xf32>, vector<32x128xf32> -> vector<32x128xf32>
    %c0_25 = arith.constant 0 : index
    %c0_26 = arith.constant 0 : index
    %42 = vector.load %arg1[%c0_25, %c0_26] : memref<1x128xf32, #tpu.memory_space<vmem>>, vector<1x128xf32>
    %43 = vector.broadcast %42 : vector<1x128xf32> to vector<32x128xf32>
    %44 = arith.mulf %41, %43 : vector<32x128xf32>
    %cst_27 = arith.constant dense<0.000000e+00> : vector<32xf32>
    %45 = vector.multi_reduction <add>, %44, %cst_27 [1] : vector<32x128xf32> to vector<32xf32>
    %46 = vector.shape_cast %45 : vector<32xf32> to vector<32x1xf32>
    %47 = arith.mulf %44, %41 : vector<32x128xf32>
    %cst_28 = arith.constant dense<0.000000e+00> : vector<32xf32>
    %48 = vector.multi_reduction <add>, %47, %cst_28 [1] : vector<32x128xf32> to vector<32xf32>
    %49 = vector.shape_cast %48 : vector<32xf32> to vector<32x1xf32>
    %cst_29 = arith.constant 3.200000e+01 : f32
    %50 = vector.broadcast %cst_29 : f32 to vector<32x1xf32>
    %51 = arith.divf %46, %50 : vector<32x1xf32>
    %cst_30 = arith.constant 3.200000e+01 : f32
    %52 = vector.broadcast %cst_30 : f32 to vector<32x1xf32>
    %53 = arith.divf %49, %52 : vector<32x1xf32>
    %54 = arith.mulf %51, %51 : vector<32x1xf32>
    %55 = arith.subf %53, %54 : vector<32x1xf32>
    %cst_31 = arith.constant 0.000000e+00 : f32
    %56 = vector.broadcast %cst_31 : f32 to vector<32x1xf32>
    %57 = arith.maximumf %55, %56 : vector<32x1xf32>
    %58 = vector.broadcast %51 : vector<32x1xf32> to vector<32x128xf32>
    %59 = arith.subf %41, %58 : vector<32x128xf32>
    %cst_32 = arith.constant 9.99999974E-6 : f32
    %60 = vector.broadcast %cst_32 : f32 to vector<32x1xf32>
    %61 = arith.addf %57, %60 : vector<32x1xf32>
    %62 = math.rsqrt %61 : vector<32x1xf32>
    %63 = vector.broadcast %62 : vector<32x1xf32> to vector<32x128xf32>
    %64 = arith.mulf %59, %63 : vector<32x128xf32>
    %c0_33 = arith.constant 0 : index
    %c0_34 = arith.constant 0 : index
    %65 = vector.load %arg6[%c0_33, %c0_34] : memref<32x1xf32, #tpu.memory_space<vmem>>, vector<32x1xf32>
    %66 = vector.broadcast %65 : vector<32x1xf32> to vector<32x128xf32>
    %67 = arith.mulf %64, %66 : vector<32x128xf32>
    %c0_35 = arith.constant 0 : index
    %c0_36 = arith.constant 0 : index
    %68 = vector.load %arg7[%c0_35, %c0_36] : memref<32x1xf32, #tpu.memory_space<vmem>>, vector<32x1xf32>
    %69 = vector.broadcast %68 : vector<32x1xf32> to vector<32x128xf32>
    %70 = arith.addf %67, %69 : vector<32x128xf32>
    %cst_37 = arith.constant 0.000000e+00 : f32
    %71 = vector.broadcast %cst_37 : f32 to vector<32x128xf32>
    %72 = arith.maximumf %70, %71 : vector<32x128xf32>
    %c0_38 = arith.constant 0 : index
    %c0_39 = arith.constant 0 : index
    %73 = vector.load %arg8[%c0_38, %c0_39] : memref<32x128xf32, #tpu.memory_space<vmem>>, vector<32x128xf32>
    tpu.vector_store %arg8[%c0_38, %c0_39], %72 {strides = array<i32>} : memref<32x128xf32, #tpu.memory_space<vmem>>, vector<32x128xf32>,
    return
  }
}

</mosaic_0001>

<llo_original>
// kernel: cnn_forward.1
$region0: #{cnn_forward.1}
  #allocation0 [shape = 'u32[]', space=smem, size = 0x4, offset = 0x4, fixed_abs, tag = 'smem constant byte address 0x4 - core index']
  #allocation1 [shape = 'u32[144,128]{1,0:T(1,128)}', space=vmem, size = 0x12000, scoped, tag = 'internal scratch']
  #allocation2 [shape = 'f32[3,128]{1,0:T(4,128)}', space=vmem, size = 0x800, scoped, tag = 'scratch operand']
  %s0 = inlined_call_operand.vmem [shape: f32[1,128], index: 0, kind: input, shape index: {}]
  %s1 = inlined_call_operand.vmem [shape: f32[1,128], index: 1, kind: input, shape index: {}]
  %s2 = inlined_call_operand.vmem [shape: f32[16,3], index: 2, kind: input, shape index: {}]
  %s3 = inlined_call_operand.vmem [shape: f32[16,1], index: 3, kind: input, shape index: {}]
  %s4 = inlined_call_operand.vmem [shape: f32[16,1], index: 4, kind: input, shape index: {}]
  %s5 = inlined_call_operand.vmem [shape: f32[32,48], index: 5, kind: input, shape index: {}]
  %s6 = inlined_call_operand.vmem [shape: f32[32,1], index: 6, kind: input, shape index: {}]
  %s7 = inlined_call_operand.vmem [shape: f32[32,1], index: 7, kind: input, shape index: {}]
  %s8 = inlined_call_operand.vmem [shape: f32[32,128], index: 8, kind: output, shape index: {}]
  %s9 = sld [smem:[#allocation0]]
  $region42: #{cnn_forward.1} parent=0
    _
  %s11 = ssub.s32 1, %s9
  %s12 = scalar_select 0, %s11, %s9
  // Predicated region
  $region2: #{cnn_forward.1} parent=0 // pred_check
    _
  $region3: #{cnn_forward.1} parent=0 // pred_check_branch
    %14 = sbr.rel (0) target = $region5
  $region4: #{cnn_forward.1} parent=0 // pred_region
    _
  $region5: #{cnn_forward.1} parent=0 // pred_fallthru
    _
  // Predicated region
  $region6: #{cnn_forward.1} parent=0 // pred_check
    _
  $region7: #{cnn_forward.1} parent=0 // pred_check_branch
    %16 = sbr.rel (0) target = $region9
  $region8: #{cnn_forward.1} parent=0 // pred_region
    _
  $region9: #{cnn_forward.1} parent=0 // pred_fallthru
    _
  // Predicated region
  $region10: #{cnn_forward.1} parent=0 // pred_check
    _
  $region11: #{cnn_forward.1} parent=0 // pred_check_branch
    %18 = sbr.rel (0) target = $region13
  $region12: #{cnn_forward.1} parent=0 // pred_region
    _
  $region13: #{cnn_forward.1} parent=0 // pred_fallthru
    _
  // Predicated region
  $region14: #{cnn_forward.1} parent=0 // pred_check
    _
  $region15: #{cnn_forward.1} parent=0 // pred_check_branch
    %20 = sbr.rel (0) target = $region17
  $region16: #{cnn_forward.1} parent=0 // pred_region
    _
  $region17: #{cnn_forward.1} parent=0 // pred_fallthru
    _
  // Predicated region
  $region18: #{cnn_forward.1} parent=0 // pred_check
    _
  $region19: #{cnn_forward.1} parent=0 // pred_check_branch
    %22 = sbr.rel (0) target = $region21
  $region20: #{cnn_forward.1} parent=0 // pred_region
    _
  $region21: #{cnn_forward.1} parent=0 // pred_fallthru
    _
  // Predicated region
  $region22: #{cnn_forward.1} parent=0 // pred_check
    _
  $region23: #{cnn_forward.1} parent=0 // pred_check_branch
    %24 = sbr.rel (0) target = $region25
  $region24: #{cnn_forward.1} parent=0 // pred_region
    _
  $region25: #{cnn_forward.1} parent=0 // pred_fallthru
    _
  // Predicated region
  $region26: #{cnn_forward.1} parent=0 // pred_check
    _
  $region27: #{cnn_forward.1} parent=0 // pred_check_branch
    %26 = sbr.rel (0) target = $region29
  $region28: #{cnn_forward.1} parent=0 // pred_region
    _
  $region29: #{cnn_forward.1} parent=0 // pred_fallthru
    _
  // Predicated region
  $region30: #{cnn_forward.1} parent=0 // pred_check
    _
  $region31: #{cnn_forward.1} parent=0 // pred_check_branch
    %28 = sbr.rel (0) target = $region33
  $region32: #{cnn_forward.1} parent=0 // pred_region
    _
  $region33: #{cnn_forward.1} parent=0 // pred_fallthru
    _
  %v29 = vld [vmem:[%s0] sm:$0x1]
  %30 = vst [vmem:[#allocation2] sm:$0x1] %v29
  %31 = vrot.lane.b32.xlu0 %v29, 127
  %v32 = vpop.permute.xlu0 %31
  %33 = vst [vmem:[#allocation2 + $0x1] sm:$0x1] %v32
  %34 = vrot.lane.b32.xlu0 %v29, 126
  %v35 = vpop.permute.xlu0 %34
  %36 = vst [vmem:[#allocation2 + $0x2] sm:$0x1] %v35
  %v37 = vld [vmem:[%s2] sm:$0xff]
  %v38 = vld [vmem:[%s2 + $0x8] sm:$0xff]
  %v39 = vld [vmem:[#allocation2] sm:$0x7]
  %vm40 = vcmask 23552
  %v42 = vsel %vm40, %v37, 0
  %v45 = vsel %vm40, %v38, 0
  %vm47 = vcmask 1042432
  %v49 = vsel %vm47, %v39, 0
  %51 = vmatprep.subr.mxu0 0.0
  %52 = vmatpush1.msra.mxu0 %v49
  %53 = vmatprep.subr.mxu0 0.0
  %54 = vmatpush1.msra.mxu0 0.0
  %55 = vmatprep.subr.mxu0 0.0
  %56 = vmatpush1.msra.mxu0 0.0
  %57 = vmatprep.subr.mxu0 0.0
  %58 = vmatpush1.msra.mxu0 0.0
  %59 = vmatprep.subr.mxu0 0.0
  %60 = vmatpush1.msra.mxu0 0.0
  %61 = vmatprep.subr.mxu0 0.0
  %62 = vmatpush1.msra.mxu0 0.0
  %63 = vmatprep.subr.mxu0 0.0
  %64 = vmatpush1.msra.mxu0 0.0
  %65 = vmatprep.subr.mxu0 0.0
  %66 = vmatpush1.msra.mxu0 0.0
  %67 = vmatprep.subr.mxu0 0.0
  %68 = vmatpush1.msra.mxu0 0.0
  %69 = vmatprep.subr.mxu0 0.0
  %70 = vmatpush1.msra.mxu0 0.0
  %71 = vmatprep.subr.mxu0 0.0
  %72 = vmatpush1.msra.mxu0 0.0
  %73 = vmatprep.subr.mxu0 0.0
  %74 = vmatpush1.msra.mxu0 0.0
  %75 = vmatprep.subr.mxu0 0.0
  %76 = vmatpush1.msra.mxu0 0.0
  %77 = vmatprep.subr.mxu0 0.0
  %78 = vmatpush1.msra.mxu0 0.0
  %79 = vmatprep.subr.mxu0 0.0
  %80 = vmatpush1.msra.mxu0 0.0
  %81 = vmatprep.subr.mxu0 0.0
  %82 = vmatpush1.msra.mxu0 0.0
  %83 = vmatprep.subr.mxu0 0.0
  %84 = vmatpush1.msra.mxu0 0.0
  %85 = vmatprep.subr.mxu0 0.0
  %86 = vmatpush1.msra.mxu0 0.0
  %87 = vmatprep.subr.mxu0 0.0
  %88 = vmatpush1.msra.mxu0 0.0
  %89 = vmatprep.subr.mxu0 0.0
  %90 = vmatpush1.msra.mxu0 0.0
  %91 = vmatprep.subr.mxu0 0.0
  %92 = vmatpush1.msra.mxu0 0.0
  %93 = vmatprep.subr.mxu0 0.0
  %94 = vmatpush1.msra.mxu0 0.0
  %95 = vmatprep.subr.mxu0 0.0
  %96 = vmatpush1.msra.mxu0 0.0
  %97 = vmatprep.subr.mxu0 0.0
  %98 = vmatpush1.msra.mxu0 0.0
  %99 = vmatprep.subr.mxu0 0.0
  %100 = vmatpush1.msra.mxu0 0.0
  %101 = vmatprep.subr.mxu0 0.0
  %102 = vmatpush1.msra.mxu0 0.0
  %103 = vmatprep.subr.mxu0 0.0
  %104 = vmatpush1.msra.mxu0 0.0
  %105 = vmatprep.subr.mxu0 0.0
  %106 = vmatpush1.msra.mxu0 0.0
  %107 = vmatprep.subr.mxu0 0.0
  %108 = vmatpush1.msra.mxu0 0.0
  %109 = vmatprep.subr.mxu0 0.0
  %110 = vmatpush1.msra.mxu0 0.0
  %111 = vmatprep.subr.mxu0 0.0
  %112 = vmatpush1.msra.mxu0 0.0
  %113 = vmatprep.subr.mxu0 0.0
  %114 = vmatpush1.msra.mxu0 0.0
  %115 = vmatprep.mubr.f32.mxu0 0.0
  %116 = vmatmul.mubr.f32.gmra.mrb[0].mxu0 %v42
  %v117 = vpop.f32.mrb[0].mxu0
  %v118 = vadd.f32 0.0, %v117
  %v119 = vpop.f32.mrb[0].mxu0
  %120 = vmatprep.mubr.f32.mxu0 0.0
  %121 = vmatmul.mubr.f32.gmra.mrb[0].mxu0 %v45
  %v122 = vpop.f32.mrb[0].mxu0
  %v123 = vadd.f32 0.0, %v122
  %v124 = vpop.f32.mrb[0].mxu0
  %125 = vdwg.mxu0
  %126 = vadd.xlane.f32.xlu0 %v118
  %v127 = vpop.xlane.xlu0 %126
  %128 = vadd.xlane.f32.xlu0 %v123
  %v129 = vpop.xlane.xlu0 %128
  %v130 = vmul.f32 %v118, %v118
  %v131 = vmul.f32 %v123, %v123
  %132 = vadd.xlane.f32.xlu0 %v130
  %v133 = vpop.xlane.xlu0 %132
  %134 = vadd.xlane.f32.xlu0 %v131
  %v135 = vpop.xlane.xlu0 %134
  %v136 = vrcp.pop 36.0
  %v137 = vmul.f32 %v127, %v136
  %v138 = vmul.f32 %v129, %v136
  %v139 = vmul.f32 %v133, %v136
  %v140 = vmul.f32 %v135, %v136
  %v141 = vmul.f32 %v137, %v137
  %v142 = vmul.f32 %v138, %v138
  %v143 = vsub.f32 %v139, %v141
  %v144 = vsub.f32 %v140, %v142
  %v145 = vmax.f32 %v143, 0.0
  %v146 = vmax.f32 %v144, 0.0
  %v147 = vsub.f32 %v118, %v137
  %v148 = vsub.f32 %v123, %v138
  %v149 = vadd.f32 %v145, 1e-05
  %v150 = vadd.f32 %v146, 1e-05
  %v151 = vrsqrt.pop %v149
  %v152 = vrsqrt.pop %v150
  %v153 = vmul.f32 %v147, %v151
  %v154 = vmul.f32 %v148, %v152
  %v155 = vld [vmem:[%s3] sm:$0xff]
  %v156 = vld [vmem:[%s3 + $0x8] sm:$0xff]
  %158 = vset.pattern.permute.xlu0 0
  %159 = vperm.xlu0 %158, %v155
  %v160 = vpop.permute.xlu0 %159
  %163 = vset.pattern.permute.xlu0 0
  %164 = vperm.xlu0 %163, %v156
  %v165 = vpop.permute.xlu0 %164
  %v167 = vmul.f32 %v153, %v160
  %v168 = vmul.f32 %v154, %v165
  %v169 = vld [vmem:[%s4] sm:$0xff]
  %v170 = vld [vmem:[%s4 + $0x8] sm:$0xff]
  %172 = vset.pattern.permute.xlu0 0
  %173 = vperm.xlu0 %172, %v169
  %v174 = vpop.permute.xlu0 %173
  %177 = vset.pattern.permute.xlu0 0
  %178 = vperm.xlu0 %177, %v170
  %v179 = vpop.permute.xlu0 %178
  %v181 = vadd.f32 %v167, %v174
  %v182 = vadd.f32 %v168, %v179
  %v183 = vmax.f32 %v181, 0.0
  %v184 = vmax.f32 %v182, 0.0
  %185 = vrot.lane.b32.xlu0 %v183, 127
  %v186 = vpop.permute.xlu0 %185
  %187 = vrot.lane.b32.xlu0 %v184, 127
  %v188 = vpop.permute.xlu0 %187
  %189 = vrot.lane.b32.xlu0 %v183, 126
  %v190 = vpop.permute.xlu0 %189
  %191 = vrot.lane.b32.xlu0 %v184, 126
  %v192 = vpop.permute.xlu0 %191
  %v193 = vld [vmem:[%s5] sm:$0xff]
  %v194 = vld [vmem:[%s5 + $0x8] sm:$0xff]
  %v195 = vld [vmem:[%s5 + $0x10] sm:$0xff]
  %v196 = vld [vmem:[%s5 + $0x18] sm:$0xff]
  %vm197 = vcmask 392192
  %v199 = vsel %vm197, %v193, 0
  %v202 = vsel %vm197, %v194, 0
  %v205 = vsel %vm197, %v195, 0
  %v208 = vsel %vm197, %v196, 0
  %210 = vmatprep.subr.mxu0 0.0
  %211 = vmatpush1.msra.mxu0 %v183
  %212 = vmatprep.subr.mxu0 0.0
  %213 = vmatpush1.msra.mxu0 %v184
  %214 = vmatprep.subr.mxu0 0.0
  %215 = vmatpush1.msra.mxu0 %v186
  %216 = vmatprep.subr.mxu0 0.0
  %217 = vmatpush1.msra.mxu0 %v188
  %218 = vmatprep.subr.mxu0 0.0
  %219 = vmatpush1.msra.mxu0 %v190
  %220 = vmatprep.subr.mxu0 0.0
  %221 = vmatpush1.msra.mxu0 %v192
  %222 = vmatprep.subr.mxu0 0.0
  %223 = vmatpush1.msra.mxu0 0.0
  %224 = vmatprep.subr.mxu0 0.0
  %225 = vmatpush1.msra.mxu0 0.0
  %226 = vmatprep.subr.mxu0 0.0
  %227 = vmatpush1.msra.mxu0 0.0
  %228 = vmatprep.subr.mxu0 0.0
  %229 = vmatpush1.msra.mxu0 0.0
  %230 = vmatprep.subr.mxu0 0.0
  %231 = vmatpush1.msra.mxu0 0.0
  %232 = vmatprep.subr.mxu0 0.0
  %233 = vmatpush1.msra.mxu0 0.0
  %234 = vmatprep.subr.mxu0 0.0
  %235 = vmatpush1.msra.mxu0 0.0
  %236 = vmatprep.subr.mxu0 0.0
  %237 = vmatpush1.msra.mxu0 0.0
  %238 = vmatprep.subr.mxu0 0.0
  %239 = vmatpush1.msra.mxu0 0.0
  %240 = vmatprep.subr.mxu0 0.0
  %241 = vmatpush1.msra.mxu0 0.0
  %242 = vmatprep.subr.mxu0 0.0
  %243 = vmatpush1.msra.mxu0 0.0
  %244 = vmatprep.subr.mxu0 0.0
  %245 = vmatpush1.msra.mxu0 0.0
  %246 = vmatprep.subr.mxu0 0.0
  %247 = vmatpush1.msra.mxu0 0.0
  %248 = vmatprep.subr.mxu0 0.0
  %249 = vmatpush1.msra.mxu0 0.0
  %250 = vmatprep.subr.mxu0 0.0
  %251 = vmatpush1.msra.mxu0 0.0
  %252 = vmatprep.subr.mxu0 0.0
  %253 = vmatpush1.msra.mxu0 0.0
  %254 = vmatprep.subr.mxu0 0.0
  %255 = vmatpush1.msra.mxu0 0.0
  %256 = vmatprep.subr.mxu0 0.0
  %257 = vmatpush1.msra.mxu0 0.0
  %258 = vmatprep.subr.mxu0 0.0
  %259 = vmatpush1.msra.mxu0 0.0
  %260 = vmatprep.subr.mxu0 0.0
  %261 = vmatpush1.msra.mxu0 0.0
  %262 = vmatprep.subr.mxu0 0.0
  %263 = vmatpush1.msra.mxu0 0.0
  %264 = vmatprep.subr.mxu0 0.0
  %265 = vmatpush1.msra.mxu0 0.0
  %266 = vmatprep.subr.mxu0 0.0
  %267 = vmatpush1.msra.mxu0 0.0
  %268 = vmatprep.subr.mxu0 0.0
  %269 = vmatpush1.msra.mxu0 0.0
  %270 = vmatprep.subr.mxu0 0.0
  %271 = vmatpush1.msra.mxu0 0.0
  %272 = vmatprep.subr.mxu0 0.0
  %273 = vmatpush1.msra.mxu0 0.0
  %274 = vmatprep.mubr.f32.mxu0 0.0
  %275 = vmatmul.mubr.f32.gmra.mrb[0].mxu0 %v199
  %v276 = vpop.f32.mrb[0].mxu0
  %v277 = vadd.f32 0.0, %v276
  %v278 = vpop.f32.mrb[0].mxu0
  %279 = vmatprep.mubr.f32.mxu0 0.0
  %280 = vmatmul.mubr.f32.gmra.mrb[0].mxu0 %v202
  %v281 = vpop.f32.mrb[0].mxu0
  %v282 = vadd.f32 0.0, %v281
  %v283 = vpop.f32.mrb[0].mxu0
  %284 = vmatprep.mubr.f32.mxu0 0.0
  %285 = vmatmul.mubr.f32.gmra.mrb[0].mxu0 %v205
  %v286 = vpop.f32.mrb[0].mxu0
  %v287 = vadd.f32 0.0, %v286
  %v288 = vpop.f32.mrb[0].mxu0
  %289 = vmatprep.mubr.f32.mxu0 0.0
  %290 = vmatmul.mubr.f32.gmra.mrb[0].mxu0 %v208
  %v291 = vpop.f32.mrb[0].mxu0
  %v292 = vadd.f32 0.0, %v291
  %v293 = vpop.f32.mrb[0].mxu0
  %294 = vdwg.mxu0
  %v295 = vld [vmem:[%s1] sm:$0x1]
  %v297 = vlaneseq
  %v298 = vshrl.u32 %v297, 7
  %v299 = vsub.s32 0, %v298
  %v300 = vrot.slane %v295, %v299
  %v302 = vmul.f32 %v277, %v300
  %v303 = vmul.f32 %v282, %v300
  %v304 = vmul.f32 %v287, %v300
  %v305 = vmul.f32 %v292, %v300
  %306 = vadd.xlane.f32.xlu0 %v302
  %v307 = vpop.xlane.xlu0 %306
  %308 = vadd.xlane.f32.xlu0 %v303
  %v309 = vpop.xlane.xlu0 %308
  %310 = vadd.xlane.f32.xlu0 %v304
  %v311 = vpop.xlane.xlu0 %310
  %312 = vadd.xlane.f32.xlu0 %v305
  %v313 = vpop.xlane.xlu0 %312
  %v314 = vmul.f32 %v302, %v277
  %v315 = vmul.f32 %v303, %v282
  %v316 = vmul.f32 %v304, %v287
  %v317 = vmul.f32 %v305, %v292
  %318 = vadd.xlane.f32.xlu0 %v314
  %v319 = vpop.xlane.xlu0 %318
  %320 = vadd.xlane.f32.xlu0 %v315
  %v321 = vpop.xlane.xlu0 %320
  %322 = vadd.xlane.f32.xlu0 %v316
  %v323 = vpop.xlane.xlu0 %322
  %324 = vadd.xlane.f32.xlu0 %v317
  %v325 = vpop.xlane.xlu0 %324
  %v326 = vrcp.pop 32.0
  %v327 = vmul.f32 %v307, %v326
  %v328 = vmul.f32 %v309, %v326
  %v329 = vmul.f32 %v311, %v326
  %v330 = vmul.f32 %v313, %v326
  %v331 = vmul.f32 %v319, %v326
  %v332 = vmul.f32 %v321, %v326
  %v333 = vmul.f32 %v323, %v326
  %v334 = vmul.f32 %v325, %v326
  %v335 = vmul.f32 %v327, %v327
  %v336 = vmul.f32 %v328, %v328
  %v337 = vmul.f32 %v329, %v329
  %v338 = vmul.f32 %v330, %v330
  %v339 = vsub.f32 %v331, %v335
  %v340 = vsub.f32 %v332, %v336
  %v341 = vsub.f32 %v333, %v337
  %v342 = vsub.f32 %v334, %v338
  %v343 = vmax.f32 %v339, 0.0
  %v344 = vmax.f32 %v340, 0.0
  %v345 = vmax.f32 %v341, 0.0
  %v346 = vmax.f32 %v342, 0.0
  %v347 = vsub.f32 %v277, %v327
  %v348 = vsub.f32 %v282, %v328
  %v349 = vsub.f32 %v287, %v329
  %v350 = vsub.f32 %v292, %v330
  %v351 = vadd.f32 %v343, 1e-05
  %v352 = vadd.f32 %v344, 1e-05
  %v353 = vadd.f32 %v345, 1e-05
  %v354 = vadd.f32 %v346, 1e-05
  %v355 = vrsqrt.pop %v351
  %v356 = vrsqrt.pop %v352
  %v357 = vrsqrt.pop %v353
  %v358 = vrsqrt.pop %v354
  %v359 = vmul.f32 %v347, %v355
  %v360 = vmul.f32 %v348, %v356
  %v361 = vmul.f32 %v349, %v357
  %v362 = vmul.f32 %v350, %v358
  %v363 = vld [vmem:[%s6] sm:$0xff]
  %v364 = vld [vmem:[%s6 + $0x8] sm:$0xff]
  %v365 = vld [vmem:[%s6 + $0x10] sm:$0xff]
  %v366 = vld [vmem:[%s6 + $0x18] sm:$0xff]
  %368 = vset.pattern.permute.xlu0 0
  %369 = vperm.xlu0 %368, %v363
  %v370 = vpop.permute.xlu0 %369
  %373 = vset.pattern.permute.xlu0 0
  %374 = vperm.xlu0 %373, %v364
  %v375 = vpop.permute.xlu0 %374
  %378 = vset.pattern.permute.xlu0 0
  %379 = vperm.xlu0 %378, %v365
  %v380 = vpop.permute.xlu0 %379
  %383 = vset.pattern.permute.xlu0 0
  %384 = vperm.xlu0 %383, %v366
  %v385 = vpop.permute.xlu0 %384
  %v387 = vmul.f32 %v359, %v370
  %v388 = vmul.f32 %v360, %v375
  %v389 = vmul.f32 %v361, %v380
  %v390 = vmul.f32 %v362, %v385
  %v391 = vld [vmem:[%s7] sm:$0xff]
  %v392 = vld [vmem:[%s7 + $0x8] sm:$0xff]
  %v393 = vld [vmem:[%s7 + $0x10] sm:$0xff]
  %v394 = vld [vmem:[%s7 + $0x18] sm:$0xff]
  %396 = vset.pattern.permute.xlu0 0
  %397 = vperm.xlu0 %396, %v391
  %v398 = vpop.permute.xlu0 %397
  %401 = vset.pattern.permute.xlu0 0
  %402 = vperm.xlu0 %401, %v392
  %v403 = vpop.permute.xlu0 %402
  %406 = vset.pattern.permute.xlu0 0
  %407 = vperm.xlu0 %406, %v393
  %v408 = vpop.permute.xlu0 %407
  %411 = vset.pattern.permute.xlu0 0
  %412 = vperm.xlu0 %411, %v394
  %v413 = vpop.permute.xlu0 %412
  %v415 = vadd.f32 %v387, %v398
  %v416 = vadd.f32 %v388, %v403
  %v417 = vadd.f32 %v389, %v408
  %v418 = vadd.f32 %v390, %v413
  %v419 = vmax.f32 %v415, 0.0
  %v420 = vmax.f32 %v416, 0.0
  %v421 = vmax.f32 %v417, 0.0
  %v422 = vmax.f32 %v418, 0.0
  %423 = vst [vmem:[%s8] sm:$0xff] %v419
  %424 = vst [vmem:[%s8 + $0x8] sm:$0xff] %v420
  %425 = vst [vmem:[%s8 + $0x10] sm:$0xff] %v421
  %426 = vst [vmem:[%s8 + $0x18] sm:$0xff] %v422
  // Predicated region
  $region34: #{cnn_forward.1} parent=0 // pred_check
    _
  $region35: #{cnn_forward.1} parent=0 // pred_check_branch
    %428 = sbr.rel (0) target = $region37
  $region36: #{cnn_forward.1} parent=0 // pred_region
    _
  $region37: #{cnn_forward.1} parent=0 // pred_fallthru
    _
  // Predicated region
  $region38: #{cnn_forward.1} parent=0 // pred_check
    _
  $region39: #{cnn_forward.1} parent=0 // pred_check_branch
    %430 = sbr.rel (0) target = $region41
  $region40: #{cnn_forward.1} parent=0 // pred_region
    _
  $region41: #{cnn_forward.1} parent=0 // pred_fallthru
    _

</llo_original>
